<compile_context>
chip_gen: v7x
topology: tpu7x:2x2x1
jax: 0.10.0
libtpu: 0.0.40
codegen_flags: <defaults>
</compile_context>

<pallas_src>
import jax
import jax.numpy as jnp
from jax.experimental import pallas as pl
from jax.experimental.pallas import tpu as pltpu

EPS = 1e-5


def _make_kernel(N, H, W, Cin, Cout):
    NH = N * H
    WCout = W * Cout

    def kernel(x_ref, bw1_ref, b1_ref, g1_ref, be1_ref,
               bw2_ref, b2_ref, g2_ref, be2_ref, sel_ref, o_ref):
        # h-index of every (n, h) row of the (NH, WC) tile; used to zero the
        # halo rows produced by the circular sublane rolls (covers both the
        # H zero-padding and the cross-image / tile wrap-around rows).
        row_h = jax.lax.broadcasted_iota(jnp.int32, (NH, 1), 0) % H
        top = row_h == 0
        bot = row_h == H - 1

        def conv_fused(y, bw_ref, bias_ref):
            # 3x3 SAME conv as ONE deep lane-dense matmul:
            #   * kx taps + W zero-padding are folded into the banded weight,
            #   * ky taps come from XLU sublane rolls + row masks (no scratch).
            up = jnp.where(top, 0.0, pltpu.roll(y, shift=1, axis=0))       # row h-1
            dn = jnp.where(bot, 0.0, pltpu.roll(y, shift=NH - 1, axis=0))  # == -1: row h+1
            slab = jnp.concatenate([up, y, dn], axis=1)                    # (NH, 3*WCin)
            return jnp.dot(slab, bw_ref[...],
                           preferred_element_type=jnp.float32) + bias_ref[...]

        def bn_relu(y, g_ref, be_ref):
            # Training-mode BatchNorm over (N, H, W) + ReLU, all lane-dense.
            # One small matmul against the precomputed lane selector (scaled by
            # 1/NHW) both reduces per-channel sums across the W lane-groups and
            # re-broadcasts them to every lane; s1/s2 are packed so it is a
            # single MXU push per bn_relu.
            s1 = jnp.sum(y, axis=0, keepdims=True)                # (1, WCout)
            s2 = jnp.sum(y * y, axis=0, keepdims=True)            # (1, WCout)
            stats = jnp.dot(jnp.concatenate([s1, s2], axis=0), sel_ref[...],
                            preferred_element_type=jnp.float32)   # (2, WCout)
            mean = stats[0:1, :]
            # TODO(synk): switch to a shifted / two-pass variance if reused on
            # activations with a large common offset (E[x^2]-mean^2 cancels).
            var = jnp.maximum(stats[1:2, :] - mean * mean, 0.0)   # biased variance
            inv = jax.lax.rsqrt(var + EPS)
            return jnp.maximum((y - mean) * (inv * g_ref[...]) + be_ref[...], 0.0)

        h1 = bn_relu(conv_fused(x_ref[...], bw1_ref, b1_ref), g1_ref, be1_ref)
        h2 = bn_relu(conv_fused(h1, bw2_ref, b2_ref), g2_ref, be2_ref)
        o_ref[...] = h2                                           # full-width store

    return kernel


def _band_weights(w, W):
    """(3, 3, Cin, Cout) HWIO conv weight -> (3*W*Cin, W*Cout) fused band matrix.

    Band ky: B[(wo + kx - 1)*Cin + c, wo*Cout + co] = w[ky, kx, c, co]; rows that
    would index outside [0, W) are absent, which implements the SAME
    zero-padding along W.  The three ky bands are concatenated along K so the
    kernel issues a single matmul per conv (K order matches the slab concat)."""
    Cin, Cout = w.shape[2], w.shape[3]
    bands = []
    for ky in range(3):
        B = jnp.zeros((W * Cin, W * Cout), jnp.float32)
        for kx in range(3):
            shift = jnp.eye(W, k=1 - kx, dtype=jnp.float32)  # ones at (wo+kx-1, wo)
            B = B + jnp.kron(shift, w[ky, kx].astype(jnp.float32))
        bands.append(B)
    return jnp.concatenate(bands, axis=0)          # (3*W*Cin, W*Cout)


def _lane_selector(W, Cout, nhw):
    """sel[i, j] = 1/NHW iff lanes i and j hold the same channel (lane = w*C + c)."""
    lane_c = jnp.arange(W * Cout, dtype=jnp.int32) % Cout
    sel = (lane_c[:, None] == lane_c[None, :]).astype(jnp.float32)
    return sel * (1.0 / nhw)


def double_conv(x_nchw, w1, b1, g1, be1, w2, b2, g2, be2):
    """Wrapper: NCHW in / NCHW out (PyTorch convention), lane-dense inside."""
    N, Cin, H, W = x_nchw.shape
    Cout = w1.shape[-1]
    NH, WCin, WCout = N * H, W * Cin, W * Cout

    # NCHW -> NHWC, then fold (W, C) into the lane axis and (N, H) into rows.
    x = jnp.transpose(x_nchw, (0, 2, 3, 1)).astype(jnp.float32).reshape(NH, WCin)

    bw1 = _band_weights(w1, W)                     # (3*W*Cin,  W*Cout)
    bw2 = _band_weights(w2, W)                     # (3*W*Cout, W*Cout)
    sel = _lane_selector(W, Cout, N * H * W)       # (W*Cout, W*Cout), 1/NHW folded in

    def lane_vec(v):                               # (1, Cout) -> (1, W*Cout), per-lane
        return jnp.tile(jnp.reshape(v.astype(jnp.float32), (1, Cout)), (1, W))

    b1v, g1v, be1v = lane_vec(b1), lane_vec(g1), lane_vec(be1)
    b2v, g2v, be2v = lane_vec(b2), lane_vec(g2), lane_vec(be2)

    vmem = pl.BlockSpec(memory_space=pltpu.MemorySpace.VMEM)
    out = pl.pallas_call(
        _make_kernel(N, H, W, Cin, Cout),
        out_shape=jax.ShapeDtypeStruct((NH, WCout), jnp.float32),
        in_specs=[vmem] * 10,
        out_specs=vmem,
        compiler_params=pltpu.CompilerParams(vmem_limit_bytes=32 * 1024 * 1024),
    )(x, bw1, b1v, g1v, be1v, bw2, b2v, g2v, be2v, sel)

    out = out.reshape(N, H, W, Cout)
    return jnp.transpose(out, (0, 3, 1, 2))


def reference_double_conv(x_nchw, w1, b1, g1, be1, w2, b2, g2, be2):
    """Pure-JAX reference (same semantics, incl. gamma/beta) for correctness."""
    x = jnp.transpose(x_nchw, (0, 2, 3, 1)).astype(jnp.float32)

    def conv(x, w, b):
        y = jax.lax.conv_general_dilated(
            x, w, window_strides=(1, 1), padding="SAME",
            dimension_numbers=("NHWC", "HWIO", "NHWC"))
        return y + b.reshape(1, 1, 1, -1)

    def bn_relu(y, g, be):
        mean = jnp.mean(y, axis=(0, 1, 2), keepdims=True)
        var = jnp.mean((y - mean) ** 2, axis=(0, 1, 2), keepdims=True)
        yn = (y - mean) * jax.lax.rsqrt(var + EPS)
        return jnp.maximum(yn * g.reshape(1, 1, 1, -1) + be.reshape(1, 1, 1, -1), 0.0)

    y = bn_relu(conv(x, w1, b1), g1, be1)
    y = bn_relu(conv(y, w2, b2), g2, be2)
    return jnp.transpose(y, (0, 3, 1, 2))


if __name__ == "__main__":
    N, Cin, Cout, H, W = 2, 4, 8, 16, 16

    key = jax.random.PRNGKey(0)
    kx, kw1, kb1, kw2, kb2, kg1, kbe1, kg2, kbe2 = jax.random.split(key, 9)

    x = jax.random.normal(kx, (N, Cin, H, W), dtype=jnp.float32)

    # Deterministic PyTorch-style conv init (uniform in +/- 1/sqrt(fan_in)).
    bnd1 = 1.0 / (Cin * 9) ** 0.5
    w1 = jax.random.uniform(kw1, (3, 3, Cin, Cout), jnp.float32, -bnd1, bnd1)
    b1 = jax.random.uniform(kb1, (1, Cout), jnp.float32, -bnd1, bnd1)
    bnd2 = 1.0 / (Cout * 9) ** 0.5
    w2 = jax.random.uniform(kw2, (3, 3, Cout, Cout), jnp.float32, -bnd2, bnd2)
    b2 = jax.random.uniform(kb2, (1, Cout), jnp.float32, -bnd2, bnd2)

    # Non-trivial BatchNorm affine params so the gamma/beta path is actually
    # exercised (PyTorch default init is gamma=1/beta=0, which would hide a
    # broadcasting bug on that path).
    g1 = jax.random.uniform(kg1, (1, Cout), jnp.float32, 0.5, 1.5)
    be1 = jax.random.uniform(kbe1, (1, Cout), jnp.float32, -0.5, 0.5)
    g2 = jax.random.uniform(kg2, (1, Cout), jnp.float32, 0.5, 1.5)
    be2 = jax.random.uniform(kbe2, (1, Cout), jnp.float32, -0.5, 0.5)

    out = jax.jit(double_conv)(x, w1, b1, g1, be1, w2, b2, g2, be2)
    out = jax.block_until_ready(out)

    ref = reference_double_conv(x, w1, b1[0], g1[0], be1[0],
                                w2, b2[0], g2[0], be2[0])
    assert out.shape == (N, Cout, H, W)
    assert jnp.allclose(out, ref, atol=1e-3, rtol=1e-3), "mismatch vs reference"

    print("KERNEL_OK")
</pallas_src>

<mosaic_0001>
module attributes {stable_mosaic.version = 11 : i64} {
  func.func @kernel(%arg0: memref<32x64xf32, #tpu.memory_space<vmem>>, %arg1: memref<192x128xf32, #tpu.memory_space<vmem>>, %arg2: memref<1x128xf32, #tpu.memory_space<vmem>>, %arg3: memref<1x128xf32, #tpu.memory_space<vmem>>, %arg4: memref<1x128xf32, #tpu.memory_space<vmem>>, %arg5: memref<384x128xf32, #tpu.memory_space<vmem>>, %arg6: memref<1x128xf32, #tpu.memory_space<vmem>>, %arg7: memref<1x128xf32, #tpu.memory_space<vmem>>, %arg8: memref<1x128xf32, #tpu.memory_space<vmem>>, %arg9: memref<128x128xf32, #tpu.memory_space<vmem>>, %arg10: memref<32x128xf32, #tpu.memory_space<vmem>>) attributes {dimension_semantics = [], scalar_prefetch = 0 : i64, scratch_operands = 0 : i64, tpu.core_type = #tpu.core_type<tc>} {
    %0 = tpu.iota {dimensions = array<i32: 0>} : vector<32x1xi32>
    %c16_i32 = arith.constant 16 : i32
    %c0_i32 = arith.constant 0 : i32
    %1 = arith.cmpi eq, %c16_i32, %c0_i32 : i32
    %c1_i32 = arith.constant 1 : i32
    %2 = arith.select %1, %c1_i32, %c16_i32 : i32
    %3 = vector.broadcast %2 : i32 to vector<32x1xi32>
    %4 = arith.remsi %0, %3 : vector<32x1xi32>
    %c0_i32_0 = arith.constant 0 : i32
    %5 = vector.broadcast %c0_i32_0 : i32 to vector<32x1xi32>
    %6 = arith.cmpi ne, %4, %5 : vector<32x1xi32>
    %c0_i32_1 = arith.constant 0 : i32
    %7 = vector.broadcast %c0_i32_1 : i32 to vector<32x1xi32>
    %8 = arith.cmpi slt, %4, %7 : vector<32x1xi32>
    %c0_i32_2 = arith.constant 0 : i32
    %9 = arith.cmpi slt, %2, %c0_i32_2 : i32
    %10 = vector.broadcast %9 : i1 to vector<32x1xi1>
    %11 = vector.broadcast %10 : vector<32x1xi1> to vector<32x1xi1>
    %12 = arith.xori %8, %11 : vector<32x1xi1>
    %13 = arith.andi %12, %6 : vector<32x1xi1>
    %14 = vector.broadcast %2 : i32 to vector<32x1xi32>
    %15 = arith.addi %4, %14 : vector<32x1xi32>
    %16 = arith.select %13, %15, %4 : vector<32x1xi1>, vector<32x1xi32>
    %c0_i32_3 = arith.constant 0 : i32
    %17 = vector.broadcast %c0_i32_3 : i32 to vector<32x1xi32>
    %18 = arith.cmpi eq, %16, %17 : vector<32x1xi32>
    %c15_i32 = arith.constant 15 : i32
    %19 = vector.broadcast %c15_i32 : i32 to vector<32x1xi32>
    %20 = arith.cmpi eq, %16, %19 : vector<32x1xi32>
    %c0 = arith.constant 0 : index
    %c0_4 = arith.constant 0 : index
    %21 = vector.load %arg0[%c0, %c0_4] : memref<32x64xf32, #tpu.memory_space<vmem>>, vector<32x64xf32>
    %c1_i32_5 = arith.constant 1 : i32
    %22 = tpu.dynamic_rotate %21 by %c1_i32_5 dim 0 : vector<32x64xf32>, i32 -> vector<32x64xf32>
    %cst = arith.constant 0.000000e+00 : f32
    %23 = vector.shape_cast %18 : vector<32x1xi1> to vector<32x1xi1>
    %24 = vector.broadcast %23 : vector<32x1xi1> to vector<32x64xi1>
    %25 = vector.broadcast %cst : f32 to vector<32x64xf32>
    %26 = arith.select %24, %25, %22 : vector<32x64xi1>, vector<32x64xf32>
    %c31_i32 = arith.constant 31 : i32
    %27 = tpu.dynamic_rotate %21 by %c31_i32 dim 0 : vector<32x64xf32>, i32 -> vector<32x64xf32>
    %cst_6 = arith.constant 0.000000e+00 : f32
    %28 = vector.shape_cast %20 : vector<32x1xi1> to vector<32x1xi1>
    %29 = vector.broadcast %28 : vector<32x1xi1> to vector<32x64xi1>
    %30 = vector.broadcast %cst_6 : f32 to vector<32x64xf32>
    %31 = arith.select %29, %30, %27 : vector<32x64xi1>, vector<32x64xf32>
    %32 = tpu.concatenate %26, %21, %31 in 1 : vector<32x64xf32>, vector<32x64xf32>, vector<32x64xf32> -> vector<32x192xf32>
    %c0_7 = arith.constant 0 : index
    %c0_8 = arith.constant 0 : index
    %33 = vector.load %arg1[%c0_7, %c0_8] : memref<192x128xf32, #tpu.memory_space<vmem>>, vector<192x128xf32>
    %cst_9 = arith.constant dense<0.000000e+00> : vector<32x128xf32>
    %34 = tpu.matmul %32, %33, %cst_9 {dimension_numbers = #tpu.dot_dimension_numbers<[1], [0], [0], [1], [0, 0, 1, 1], [], []>} : vector<32x192xf32>, vector<192x128xf32>, vector<32x128xf32> -> vector<32x128xf32>
    %c0_10 = arith.constant 0 : index
    %c0_11 = arith.constant 0 : index
    %35 = vector.load %arg2[%c0_10, %c0_11] : memref<1x128xf32, #tpu.memory_space<vmem>>, vector<1x128xf32>
    %36 = vector.broadcast %35 : vector<1x128xf32> to vector<32x128xf32>
    %37 = arith.addf %34, %36 : vector<32x128xf32>
    %cst_12 = arith.constant dense<0.000000e+00> : vector<128xf32>
    %38 = vector.multi_reduction <add>, %37, %cst_12 [0] : vector<32x128xf32> to vector<128xf32>
    %39 = vector.shape_cast %38 : vector<128xf32> to vector<1x128xf32>
    %40 = arith.mulf %37, %37 : vector<32x128xf32>
    %cst_13 = arith.constant dense<0.000000e+00> : vector<128xf32>
    %41 = vector.multi_reduction <add>, %40, %cst_13 [0] : vector<32x128xf32> to vector<128xf32>
    %42 = vector.shape_cast %41 : vector<128xf32> to vector<1x128xf32>
    %43 = tpu.concatenate %39, %42 in 0 : vector<1x128xf32>, vector<1x128xf32> -> vector<2x128xf32>
    %c0_14 = arith.constant 0 : index
    %c0_15 = arith.constant 0 : index
    %44 = vector.load %arg9[%c0_14, %c0_15] : memref<128x128xf32, #tpu.memory_space<vmem>>, vector<128x128xf32>
    %cst_16 = arith.constant dense<0.000000e+00> : vector<2x128xf32>
    %45 = tpu.matmul %43, %44, %cst_16 {dimension_numbers = #tpu.dot_dimension_numbers<[1], [0], [0], [1], [0, 0, 1, 1], [], []>} : vector<2x128xf32>, vector<128x128xf32>, vector<2x128xf32> -> vector<2x128xf32>
    %46 = vector.extract_strided_slice %45 {offsets = [0, 0], sizes = [1, 128], strides = [1, 1]} : vector<2x128xf32> to vector<1x128xf32>
    %47 = vector.extract_strided_slice %45 {offsets = [1, 0], sizes = [1, 128], strides = [1, 1]} : vector<2x128xf32> to vector<1x128xf32>
    %48 = arith.mulf %46, %46 : vector<1x128xf32>
    %49 = arith.subf %47, %48 : vector<1x128xf32>
    %cst_17 = arith.constant 0.000000e+00 : f32
    %50 = vector.broadcast %cst_17 : f32 to vector<1x128xf32>
    %51 = arith.maximumf %49, %50 : vector<1x128xf32>
    %cst_18 = arith.constant 9.99999974E-6 : f32
    %52 = vector.broadcast %cst_18 : f32 to vector<1x128xf32>
    %53 = arith.addf %51, %52 : vector<1x128xf32>
    %54 = math.rsqrt %53 : vector<1x128xf32>
    %55 = vector.broadcast %46 : vector<1x128xf32> to vector<32x128xf32>
    %56 = arith.subf %37, %55 : vector<32x128xf32>
    %c0_19 = arith.constant 0 : index
    %c0_20 = arith.constant 0 : index
    %57 = vector.load %arg3[%c0_19, %c0_20] : memref<1x128xf32, #tpu.memory_space<vmem>>, vector<1x128xf32>
    %58 = arith.mulf %54, %57 : vector<1x128xf32>
    %59 = vector.broadcast %58 : vector<1x128xf32> to vector<32x128xf32>
    %60 = arith.mulf %56, %59 : vector<32x128xf32>
    %c0_21 = arith.constant 0 : index
    %c0_22 = arith.constant 0 : index
    %61 = vector.load %arg4[%c0_21, %c0_22] : memref<1x128xf32, #tpu.memory_space<vmem>>, vector<1x128xf32>
    %62 = vector.broadcast %61 : vector<1x128xf32> to vector<32x128xf32>
    %63 = arith.addf %60, %62 : vector<32x128xf32>
    %cst_23 = arith.constant 0.000000e+00 : f32
    %64 = vector.broadcast %cst_23 : f32 to vector<32x128xf32>
    %65 = arith.maximumf %63, %64 : vector<32x128xf32>
    %c1_i32_24 = arith.constant 1 : i32
    %66 = tpu.dynamic_rotate %65 by %c1_i32_24 dim 0 : vector<32x128xf32>, i32 -> vector<32x128xf32>
    %cst_25 = arith.constant 0.000000e+00 : f32
    %67 = vector.shape_cast %18 : vector<32x1xi1> to vector<32x1xi1>
    %68 = vector.broadcast %67 : vector<32x1xi1> to vector<32x128xi1>
    %69 = vector.broadcast %cst_25 : f32 to vector<32x128xf32>
    %70 = arith.select %68, %69, %66 : vector<32x128xi1>, vector<32x128xf32>
    %c31_i32_26 = arith.constant 31 : i32
    %71 = tpu.dynamic_rotate %65 by %c31_i32_26 dim 0 : vector<32x128xf32>, i32 -> vector<32x128xf32>
    %cst_27 = arith.constant 0.000000e+00 : f32
    %72 = vector.shape_cast %20 : vector<32x1xi1> to vector<32x1xi1>
    %73 = vector.broadcast %72 : vector<32x1xi1> to vector<32x128xi1>
    %74 = vector.broadcast %cst_27 : f32 to vector<32x128xf32>
    %75 = arith.select %73, %74, %71 : vector<32x128xi1>, vector<32x128xf32>
    %76 = tpu.concatenate %70, %65, %75 in 1 : vector<32x128xf32>, vector<32x128xf32>, vector<32x128xf32> -> vector<32x384xf32>
    %c0_28 = arith.constant 0 : index
    %c0_29 = arith.constant 0 : index
    %77 = vector.load %arg5[%c0_28, %c0_29] : memref<384x128xf32, #tpu.memory_space<vmem>>, vector<384x128xf32>
    %cst_30 = arith.constant dense<0.000000e+00> : vector<32x128xf32>
    %78 = tpu.matmul %76, %77, %cst_30 {dimension_numbers = #tpu.dot_dimension_numbers<[1], [0], [0], [1], [0, 0, 1, 1], [], []>} : vector<32x384xf32>, vector<384x128xf32>, vector<32x128xf32> -> vector<32x128xf32>
    %c0_31 = arith.constant 0 : index
    %c0_32 = arith.constant 0 : index
    %79 = vector.load %arg6[%c0_31, %c0_32] : memref<1x128xf32, #tpu.memory_space<vmem>>, vector<1x128xf32>
    %80 = vector.broadcast %79 : vector<1x128xf32> to vector<32x128xf32>
    %81 = arith.addf %78, %80 : vector<32x128xf32>
    %cst_33 = arith.constant dense<0.000000e+00> : vector<128xf32>
    %82 = vector.multi_reduction <add>, %81, %cst_33 [0] : vector<32x128xf32> to vector<128xf32>
    %83 = vector.shape_cast %82 : vector<128xf32> to vector<1x128xf32>
    %84 = arith.mulf %81, %81 : vector<32x128xf32>
    %cst_34 = arith.constant dense<0.000000e+00> : vector<128xf32>
    %85 = vector.multi_reduction <add>, %84, %cst_34 [0] : vector<32x128xf32> to vector<128xf32>
    %86 = vector.shape_cast %85 : vector<128xf32> to vector<1x128xf32>
    %87 = tpu.concatenate %83, %86 in 0 : vector<1x128xf32>, vector<1x128xf32> -> vector<2x128xf32>
    %c0_35 = arith.constant 0 : index
    %c0_36 = arith.constant 0 : index
    %88 = vector.load %arg9[%c0_35, %c0_36] : memref<128x128xf32, #tpu.memory_space<vmem>>, vector<128x128xf32>
    %cst_37 = arith.constant dense<0.000000e+00> : vector<2x128xf32>
    %89 = tpu.matmul %87, %88, %cst_37 {dimension_numbers = #tpu.dot_dimension_numbers<[1], [0], [0], [1], [0, 0, 1, 1], [], []>} : vector<2x128xf32>, vector<128x128xf32>, vector<2x128xf32> -> vector<2x128xf32>
    %90 = vector.extract_strided_slice %89 {offsets = [0, 0], sizes = [1, 128], strides = [1, 1]} : vector<2x128xf32> to vector<1x128xf32>
    %91 = vector.extract_strided_slice %89 {offsets = [1, 0], sizes = [1, 128], strides = [1, 1]} : vector<2x128xf32> to vector<1x128xf32>
    %92 = arith.mulf %90, %90 : vector<1x128xf32>
    %93 = arith.subf %91, %92 : vector<1x128xf32>
    %cst_38 = arith.constant 0.000000e+00 : f32
    %94 = vector.broadcast %cst_38 : f32 to vector<1x128xf32>
    %95 = arith.maximumf %93, %94 : vector<1x128xf32>
    %cst_39 = arith.constant 9.99999974E-6 : f32
    %96 = vector.broadcast %cst_39 : f32 to vector<1x128xf32>
    %97 = arith.addf %95, %96 : vector<1x128xf32>
    %98 = math.rsqrt %97 : vector<1x128xf32>
    %99 = vector.broadcast %90 : vector<1x128xf32> to vector<32x128xf32>
    %100 = arith.subf %81, %99 : vector<32x128xf32>
    %c0_40 = arith.constant 0 : index
    %c0_41 = arith.constant 0 : index
    %101 = vector.load %arg7[%c0_40, %c0_41] : memref<1x128xf32, #tpu.memory_space<vmem>>, vector<1x128xf32>
    %102 = arith.mulf %98, %101 : vector<1x128xf32>
    %103 = vector.broadcast %102 : vector<1x128xf32> to vector<32x128xf32>
    %104 = arith.mulf %100, %103 : vector<32x128xf32>
    %c0_42 = arith.constant 0 : index
    %c0_43 = arith.constant 0 : index
    %105 = vector.load %arg8[%c0_42, %c0_43] : memref<1x128xf32, #tpu.memory_space<vmem>>, vector<1x128xf32>
    %106 = vector.broadcast %105 : vector<1x128xf32> to vector<32x128xf32>
    %107 = arith.addf %104, %106 : vector<32x128xf32>
    %cst_44 = arith.constant 0.000000e+00 : f32
    %108 = vector.broadcast %cst_44 : f32 to vector<32x128xf32>
    %109 = arith.maximumf %107, %108 : vector<32x128xf32>
    %c0_45 = arith.constant 0 : index
    %c0_46 = arith.constant 0 : index
    %110 = vector.load %arg10[%c0_45, %c0_46] : memref<32x128xf32, #tpu.memory_space<vmem>>, vector<32x128xf32>
    tpu.vector_store %arg10[%c0_45, %c0_46], %109 {strides = array<i32>} : memref<32x128xf32, #tpu.memory_space<vmem>>, vector<32x128xf32>,
    return
  }
}

</mosaic_0001>

<llo_original>
// kernel: double_conv.1
$region0: #{double_conv.1}
  #allocation0 [shape = 'u32[]', space=smem, size = 0x4, offset = 0x4, fixed_abs, tag = 'smem constant byte address 0x4 - core index']
  #allocation1 [shape = 'u32[144,128]{1,0:T(1,128)}', space=vmem, size = 0x12000, scoped, tag = 'internal scratch']
  %s0 = inlined_call_operand.vmem [shape: f32[32,64], index: 0, kind: input, shape index: {}]
  %s1 = inlined_call_operand.vmem [shape: f32[192,128], index: 1, kind: input, shape index: {}]
  %s2 = inlined_call_operand.vmem [shape: f32[1,128], index: 2, kind: input, shape index: {}]
  %s3 = inlined_call_operand.vmem [shape: f32[1,128], index: 3, kind: input, shape index: {}]
  %s4 = inlined_call_operand.vmem [shape: f32[1,128], index: 4, kind: input, shape index: {}]
  %s5 = inlined_call_operand.vmem [shape: f32[384,128], index: 5, kind: input, shape index: {}]
  %s6 = inlined_call_operand.vmem [shape: f32[1,128], index: 6, kind: input, shape index: {}]
  %s7 = inlined_call_operand.vmem [shape: f32[1,128], index: 7, kind: input, shape index: {}]
  %s8 = inlined_call_operand.vmem [shape: f32[1,128], index: 8, kind: input, shape index: {}]
  %s9 = inlined_call_operand.vmem [shape: f32[128,128], index: 9, kind: input, shape index: {}]
  %s10 = inlined_call_operand.vmem [shape: f32[32,128], index: 10, kind: output, shape index: {}]
  %s11 = sld [smem:[#allocation0]]
  $region50: #{double_conv.1} parent=0
    _
  %s13 = ssub.s32 1, %s11
  %s14 = scalar_select 0, %s13, %s11
  // Predicated region
  $region2: #{double_conv.1} parent=0 // pred_check
    _
  $region3: #{double_conv.1} parent=0 // pred_check_branch
    %16 = sbr.rel (0) target = $region5
  $region4: #{double_conv.1} parent=0 // pred_region
    _
  $region5: #{double_conv.1} parent=0 // pred_fallthru
    _
  // Predicated region
  $region6: #{double_conv.1} parent=0 // pred_check
    _
  $region7: #{double_conv.1} parent=0 // pred_check_branch
    %18 = sbr.rel (0) target = $region9
  $region8: #{double_conv.1} parent=0 // pred_region
    _
  $region9: #{double_conv.1} parent=0 // pred_fallthru
    _
  // Predicated region
  $region10: #{double_conv.1} parent=0 // pred_check
    _
  $region11: #{double_conv.1} parent=0 // pred_check_branch
    %20 = sbr.rel (0) target = $region13
  $region12: #{double_conv.1} parent=0 // pred_region
    _
  $region13: #{double_conv.1} parent=0 // pred_fallthru
    _
  // Predicated region
  $region14: #{double_conv.1} parent=0 // pred_check
    _
  $region15: #{double_conv.1} parent=0 // pred_check_branch
    %22 = sbr.rel (0) target = $region17
  $region16: #{double_conv.1} parent=0 // pred_region
    _
  $region17: #{double_conv.1} parent=0 // pred_fallthru
    _
  // Predicated region
  $region18: #{double_conv.1} parent=0 // pred_check
    _
  $region19: #{double_conv.1} parent=0 // pred_check_branch
    %24 = sbr.rel (0) target = $region21
  $region20: #{double_conv.1} parent=0 // pred_region
    _
  $region21: #{double_conv.1} parent=0 // pred_fallthru
    _
  // Predicated region
  $region22: #{double_conv.1} parent=0 // pred_check
    _
  $region23: #{double_conv.1} parent=0 // pred_check_branch
    %26 = sbr.rel (0) target = $region25
  $region24: #{double_conv.1} parent=0 // pred_region
    _
  $region25: #{double_conv.1} parent=0 // pred_fallthru
    _
  // Predicated region
  $region26: #{double_conv.1} parent=0 // pred_check
    _
  $region27: #{double_conv.1} parent=0 // pred_check_branch
    %28 = sbr.rel (0) target = $region29
  $region28: #{double_conv.1} parent=0 // pred_region
    _
  $region29: #{double_conv.1} parent=0 // pred_fallthru
    _
  // Predicated region
  $region30: #{double_conv.1} parent=0 // pred_check
    _
  $region31: #{double_conv.1} parent=0 // pred_check_branch
    %30 = sbr.rel (0) target = $region33
  $region32: #{double_conv.1} parent=0 // pred_region
    _
  $region33: #{double_conv.1} parent=0 // pred_fallthru
    _
  // Predicated region
  $region34: #{double_conv.1} parent=0 // pred_check
    _
  $region35: #{double_conv.1} parent=0 // pred_check_branch
    %32 = sbr.rel (0) target = $region37
  $region36: #{double_conv.1} parent=0 // pred_region
    _
  $region37: #{double_conv.1} parent=0 // pred_fallthru
    _
  // Predicated region
  $region38: #{double_conv.1} parent=0 // pred_check
    _
  $region39: #{double_conv.1} parent=0 // pred_check_branch
    %34 = sbr.rel (0) target = $region41
  $region40: #{double_conv.1} parent=0 // pred_region
    _
  $region41: #{double_conv.1} parent=0 // pred_fallthru
    _
  %v35 = vlaneseq
  %v36 = vshrl.u32 %v35, 7
  %v37 = vadd.s32 %v36, 8
  %v38 = vadd.s32 %v36, 16
  %v39 = vadd.s32 %v36, 24
  %vm40 = vcmp.lt.s32.totalorder %v36, 0
  %v41 = vsub.s32 0, %v36
  %v42 = vsel %vm40, %v41, %v36
  %v43 = vshrl.u32 %v42, 4
  %v44 = vand.u32 %v42, 15
  %v45 = vsub.s32 0, %v44
  %v46 = vsel %vm40, %v45, %v44
  %vm47 = vcmp.lt.s32.totalorder %v37, 0
  %v48 = vsub.s32 0, %v37
  %v49 = vsel %vm47, %v48, %v37
  %v50 = vshrl.u32 %v49, 4
  %v51 = vand.u32 %v49, 15
  %v52 = vsub.s32 0, %v51
  %v53 = vsel %vm47, %v52, %v51
  %vm54 = vcmp.lt.s32.totalorder %v38, 0
  %v55 = vsub.s32 0, %v38
  %v56 = vsel %vm54, %v55, %v38
  %v57 = vshrl.u32 %v56, 4
  %v58 = vand.u32 %v56, 15
  %v59 = vsub.s32 0, %v58
  %v60 = vsel %vm54, %v59, %v58
  %vm61 = vcmp.lt.s32.totalorder %v39, 0
  %v62 = vsub.s32 0, %v39
  %v63 = vsel %vm61, %v62, %v39
  %v64 = vshrl.u32 %v63, 4
  %v65 = vand.u32 %v63, 15
  %v66 = vsub.s32 0, %v65
  %v67 = vsel %vm61, %v66, %v65
  %vm68 = vcmp.ne.s32.totalorder %v46, 0
  %vm69 = vcmp.ne.s32.totalorder %v53, 0
  %vm70 = vcmp.ne.s32.totalorder %v60, 0
  %vm71 = vcmp.ne.s32.totalorder %v67, 0
  %vm72 = vcmp.lt.s32.totalorder %v46, 0
  %vm73 = vcmp.lt.s32.totalorder %v53, 0
  %vm74 = vcmp.lt.s32.totalorder %v60, 0
  %vm75 = vcmp.lt.s32.totalorder %v67, 0
  %vm76 = vmand %vm72, %vm68
  %vm77 = vmand %vm73, %vm69
  %vm78 = vmand %vm74, %vm70
  %vm79 = vmand %vm75, %vm71
  %v80 = vadd.s32 %v46, 16
  %v81 = vadd.s32 %v53, 16
  %v82 = vadd.s32 %v60, 16
  %v83 = vadd.s32 %v67, 16
  %v84 = vsel %vm76, %v80, %v46
  %v85 = vsel %vm77, %v81, %v53
  %v86 = vsel %vm78, %v82, %v60
  %v87 = vsel %vm79, %v83, %v67
  %vm88 = vcmp.eq.s32.totalorder %v84, 0
  %vm89 = vcmp.eq.s32.totalorder %v85, 0
  %vm90 = vcmp.eq.s32.totalorder %v86, 0
  %vm91 = vcmp.eq.s32.totalorder %v87, 0
  %vm92 = vcmp.eq.s32.totalorder %v84, 15
  %vm93 = vcmp.eq.s32.totalorder %v85, 15
  %vm94 = vcmp.eq.s32.totalorder %v86, 15
  %vm95 = vcmp.eq.s32.totalorder %v87, 15
  %v96 = vld [vmem:[%s0] sm:$0xff]
  %v97 = vld [vmem:[%s0 + $0x8] sm:$0xff]
  %v98 = vld [vmem:[%s0 + $0x10] sm:$0xff]
  %v99 = vld [vmem:[%s0 + $0x18] sm:$0xff]
  %v100 = vrot.slane %v96, 7
  %v101 = vrot.slane %v97, 7
  %v102 = vrot.slane %v98, 7
  %v103 = vrot.slane %v99, 7
  %vm104 = vcmp.lt.s32.totalorder %v36, 1
  %v105 = vsel %vm104, %v102, %v103
  %v106 = vsel %vm104, %v101, %v102
  %v107 = vsel %vm104, %v100, %v101
  %v108 = vsel %vm104, %v103, %v100
  %v109 = vsel %vm88, 1, 0
  %v110 = vsel %vm89, 1, 0
  %v111 = vsel %vm90, 1, 0
  %v112 = vsel %vm91, 1, 0
  %vm113 = vcmp.eq.s32.totalorder %v109, 1
  %vm114 = vcmp.eq.s32.totalorder %v110, 1
  %vm115 = vcmp.eq.s32.totalorder %v111, 1
  %vm116 = vcmp.eq.s32.totalorder %v112, 1
  %v117 = vsel %vm113, 0.0, %v108
  %v118 = vsel %vm114, 0.0, %v107
  %v119 = vsel %vm115, 0.0, %v106
  %v120 = vsel %vm116, 0.0, %v105
  %v121 = vrot.slane %v96, 1
  %v122 = vrot.slane %v97, 1
  %v123 = vrot.slane %v98, 1
  %v124 = vrot.slane %v99, 1
  %vm125 = vcmp.lt.s32.totalorder %v36, 7
  %v126 = vsel %vm125, %v123, %v124
  %v127 = vsel %vm125, %v122, %v123
  %v128 = vsel %vm125, %v121, %v122
  %v129 = vsel %vm125, %v124, %v121
  %v130 = vsel %vm92, 1, 0
  %v131 = vsel %vm93, 1, 0
  %v132 = vsel %vm94, 1, 0
  %v133 = vsel %vm95, 1, 0
  %vm134 = vcmp.eq.s32.totalorder %v130, 1
  %vm135 = vcmp.eq.s32.totalorder %v131, 1
  %vm136 = vcmp.eq.s32.totalorder %v132, 1
  %vm137 = vcmp.eq.s32.totalorder %v133, 1
  %v138 = vsel %vm134, 0.0, %v128
  %v139 = vsel %vm135, 0.0, %v127
  %v140 = vsel %vm136, 0.0, %v126
  %v141 = vsel %vm137, 0.0, %v129
  %146 = vrot.lane.b32.xlu0 %v96, 64
  %v147 = vpop.permute.xlu0 %146
  %148 = vrot.lane.b32.xlu0 %v97, 64
  %v149 = vpop.permute.xlu0 %148
  %150 = vrot.lane.b32.xlu0 %v98, 64
  %v151 = vpop.permute.xlu0 %150
  %152 = vrot.lane.b32.xlu0 %v99, 64
  %v153 = vpop.permute.xlu0 %152
  %vm158 = vcmask 523264
  %v159 = vsel %vm158, %v117, %v147
  %v160 = vsel %vm158, %v118, %v149
  %v161 = vsel %vm158, %v119, %v151
  %v162 = vsel %vm158, %v120, %v153
  %v163 = vld [vmem:[%s1] sm:$0xff]
  %v164 = vld [vmem:[%s1 + $0x8] sm:$0xff]
  %v165 = vld [vmem:[%s1 + $0x10] sm:$0xff]
  %v166 = vld [vmem:[%s1 + $0x18] sm:$0xff]
  %v167 = vld [vmem:[%s1 + $0x20] sm:$0xff]
  %v168 = vld [vmem:[%s1 + $0x28] sm:$0xff]
  %v169 = vld [vmem:[%s1 + $0x30] sm:$0xff]
  %v170 = vld [vmem:[%s1 + $0x38] sm:$0xff]
  %v171 = vld [vmem:[%s1 + $0x40] sm:$0xff]
  %v172 = vld [vmem:[%s1 + $0x48] sm:$0xff]
  %v173 = vld [vmem:[%s1 + $0x50] sm:$0xff]
  %v174 = vld [vmem:[%s1 + $0x58] sm:$0xff]
  %v175 = vld [vmem:[%s1 + $0x60] sm:$0xff]
  %v176 = vld [vmem:[%s1 + $0x68] sm:$0xff]
  %v177 = vld [vmem:[%s1 + $0x70] sm:$0xff]
  %v178 = vld [vmem:[%s1 + $0x78] sm:$0xff]
  %v179 = vld [vmem:[%s1 + $0x80] sm:$0xff]
  %v180 = vld [vmem:[%s1 + $0x88] sm:$0xff]
  %v181 = vld [vmem:[%s1 + $0x90] sm:$0xff]
  %v182 = vld [vmem:[%s1 + $0x98] sm:$0xff]
  %v183 = vld [vmem:[%s1 + $0xa0] sm:$0xff]
  %v184 = vld [vmem:[%s1 + $0xa8] sm:$0xff]
  %v185 = vld [vmem:[%s1 + $0xb0] sm:$0xff]
  %v186 = vld [vmem:[%s1 + $0xb8] sm:$0xff]
  %v187 = vld [vmem:[%s2] sm:$0x1]
  %v189 = vlaneseq
  %v190 = vshrl.u32 %v189, 7
  %v191 = vsub.s32 0, %v190
  %v192 = vrot.slane %v187, %v191
  %v195 = vsel %vm158, %v138, 0
  %v198 = vsel %vm158, %v139, 0
  %v201 = vsel %vm158, %v140, 0
  %v204 = vsel %vm158, %v141, 0
  %206 = vmatprep.subr.mxu0 0.0
  %207 = vmatpush1.msra.mxu0 %v163
  %208 = vmatprep.subr.mxu0 0.0
  %209 = vmatpush1.msra.mxu0 %v164
  %210 = vmatprep.subr.mxu0 0.0
  %211 = vmatpush1.msra.mxu0 %v165
  %212 = vmatprep.subr.mxu0 0.0
  %213 = vmatpush1.msra.mxu0 %v166
  %214 = vmatprep.subr.mxu0 0.0
  %215 = vmatpush1.msra.mxu0 %v167
  %216 = vmatprep.subr.mxu0 0.0
  %217 = vmatpush1.msra.mxu0 %v168
  %218 = vmatprep.subr.mxu0 0.0
  %219 = vmatpush1.msra.mxu0 %v169
  %220 = vmatprep.subr.mxu0 0.0
  %221 = vmatpush1.msra.mxu0 %v170
  %222 = vmatprep.subr.mxu0 0.0
  %223 = vmatpush1.msra.mxu0 %v171
  %224 = vmatprep.subr.mxu0 0.0
  %225 = vmatpush1.msra.mxu0 %v172
  %226 = vmatprep.subr.mxu0 0.0
  %227 = vmatpush1.msra.mxu0 %v173
  %228 = vmatprep.subr.mxu0 0.0
  %229 = vmatpush1.msra.mxu0 %v174
  %230 = vmatprep.subr.mxu0 0.0
  %231 = vmatpush1.msra.mxu0 %v175
  %232 = vmatprep.subr.mxu0 0.0
  %233 = vmatpush1.msra.mxu0 %v176
  %234 = vmatprep.subr.mxu0 0.0
  %235 = vmatpush1.msra.mxu0 %v177
  %236 = vmatprep.subr.mxu0 0.0
  %237 = vmatpush1.msra.mxu0 %v178
  %238 = vmatprep.subr.mxu0 0.0
  %239 = vmatpush1.msra.mxu0 %v179
  %240 = vmatprep.subr.mxu0 0.0
  %241 = vmatpush1.msra.mxu0 %v180
  %242 = vmatprep.subr.mxu0 0.0
  %243 = vmatpush1.msra.mxu0 %v181
  %244 = vmatprep.subr.mxu0 0.0
  %245 = vmatpush1.msra.mxu0 %v182
  %246 = vmatprep.subr.mxu0 0.0
  %247 = vmatpush1.msra.mxu0 %v183
  %248 = vmatprep.subr.mxu0 0.0
  %249 = vmatpush1.msra.mxu0 %v184
  %250 = vmatprep.subr.mxu0 0.0
  %251 = vmatpush1.msra.mxu0 %v185
  %252 = vmatprep.subr.mxu0 0.0
  %253 = vmatpush1.msra.mxu0 %v186
  %254 = vmatprep.subr.mxu0 0.0
  %255 = vmatpush1.msra.mxu0 0.0
  %256 = vmatprep.subr.mxu0 0.0
  %257 = vmatpush1.msra.mxu0 0.0
  %258 = vmatprep.subr.mxu0 0.0
  %259 = vmatpush1.msra.mxu0 0.0
  %260 = vmatprep.subr.mxu0 0.0
  %261 = vmatpush1.msra.mxu0 0.0
  %262 = vmatprep.subr.mxu0 0.0
  %263 = vmatpush1.msra.mxu0 0.0
  %264 = vmatprep.subr.mxu0 0.0
  %265 = vmatpush1.msra.mxu0 0.0
  %266 = vmatprep.subr.mxu0 0.0
  %267 = vmatpush1.msra.mxu0 0.0
  %268 = vmatprep.subr.mxu0 0.0
  %269 = vmatpush1.msra.mxu0 0.0
  %270 = vmatprep.mubr.f32.mxu0 %v195
  %271 = vmatmul.mubr.f32.gmra.mrb[0].mxu0 %v159
  %v272 = vpop.f32.mrb[0].mxu0
  %v273 = vadd.f32 %v192, %v272
  %v274 = vpop.f32.mrb[0].mxu0
  %275 = vmatprep.mubr.f32.mxu0 %v198
  %276 = vmatmul.mubr.f32.gmra.mrb[0].mxu0 %v160
  %v277 = vpop.f32.mrb[0].mxu0
  %v278 = vadd.f32 %v192, %v277
  %v279 = vpop.f32.mrb[0].mxu0
  %280 = vmatprep.mubr.f32.mxu0 %v201
  %281 = vmatmul.mubr.f32.gmra.mrb[0].mxu0 %v161
  %v282 = vpop.f32.mrb[0].mxu0
  %v283 = vadd.f32 %v192, %v282
  %v284 = vpop.f32.mrb[0].mxu0
  %285 = vmatprep.mubr.f32.mxu0 %v204
  %286 = vmatmul.mubr.f32.gmra.mrb[0].mxu0 %v162
  %v287 = vpop.f32.mrb[0].mxu0
  %v288 = vadd.f32 %v192, %v287
  %v289 = vpop.f32.mrb[0].mxu0
  %290 = vdwg.mxu0
  %v291 = vadd.f32 %v273, %v278
  %v292 = vadd.f32 %v291, %v283
  %v293 = vadd.f32 %v292, %v288
  %v294 = vrot.slane %v293, 4
  %v295 = vadd.f32 %v293, %v294
  %v296 = vrot.slane %v295, 2
  %v297 = vadd.f32 %v295, %v296
  %v298 = vrot.slane %v297, 1
  %v299 = vadd.f32 %v297, %v298
  %v300 = vmul.f32 %v273, %v273
  %v301 = vmul.f32 %v278, %v278
  %v302 = vmul.f32 %v283, %v283
  %v303 = vmul.f32 %v288, %v288
  %v304 = vadd.f32 %v300, %v301
  %v305 = vadd.f32 %v304, %v302
  %v306 = vadd.f32 %v305, %v303
  %v307 = vrot.slane %v306, 4
  %v308 = vadd.f32 %v306, %v307
  %v309 = vrot.slane %v308, 2
  %v310 = vadd.f32 %v308, %v309
  %v311 = vrot.slane %v310, 1
  %v312 = vadd.f32 %v310, %v311
  %vm313 = vcmask 1040384
  %v314 = vsel %vm313, %v299, %v312
  %v315 = vld [vmem:[%s9] sm:$0xff]
  %v316 = vld [vmem:[%s9 + $0x8] sm:$0xff]
  %v317 = vld [vmem:[%s9 + $0x10] sm:$0xff]
  %v318 = vld [vmem:[%s9 + $0x18] sm:$0xff]
  %v319 = vld [vmem:[%s9 + $0x20] sm:$0xff]
  %v320 = vld [vmem:[%s9 + $0x28] sm:$0xff]
  %v321 = vld [vmem:[%s9 + $0x30] sm:$0xff]
  %v322 = vld [vmem:[%s9 + $0x38] sm:$0xff]
  %v323 = vld [vmem:[%s9 + $0x40] sm:$0xff]
  %v324 = vld [vmem:[%s9 + $0x48] sm:$0xff]
  %v325 = vld [vmem:[%s9 + $0x50] sm:$0xff]
  %v326 = vld [vmem:[%s9 + $0x58] sm:$0xff]
  %v327 = vld [vmem:[%s9 + $0x60] sm:$0xff]
  %v328 = vld [vmem:[%s9 + $0x68] sm:$0xff]
  %v329 = vld [vmem:[%s9 + $0x70] sm:$0xff]
  %v330 = vld [vmem:[%s9 + $0x78] sm:$0xff]
  %331 = vmatprep.subr.mxu0 0.0
  %332 = vmatpush1.msra.mxu0 %v315
  %333 = vmatprep.subr.mxu0 0.0
  %334 = vmatpush1.msra.mxu0 %v316
  %335 = vmatprep.subr.mxu0 0.0
  %336 = vmatpush1.msra.mxu0 %v317
  %337 = vmatprep.subr.mxu0 0.0
  %338 = vmatpush1.msra.mxu0 %v318
  %339 = vmatprep.subr.mxu0 0.0
  %340 = vmatpush1.msra.mxu0 %v319
  %341 = vmatprep.subr.mxu0 0.0
  %342 = vmatpush1.msra.mxu0 %v320
  %343 = vmatprep.subr.mxu0 0.0
  %344 = vmatpush1.msra.mxu0 %v321
  %345 = vmatprep.subr.mxu0 0.0
  %346 = vmatpush1.msra.mxu0 %v322
  %347 = vmatprep.subr.mxu0 0.0
  %348 = vmatpush1.msra.mxu0 %v323
  %349 = vmatprep.subr.mxu0 0.0
  %350 = vmatpush1.msra.mxu0 %v324
  %351 = vmatprep.subr.mxu0 0.0
  %352 = vmatpush1.msra.mxu0 %v325
  %353 = vmatprep.subr.mxu0 0.0
  %354 = vmatpush1.msra.mxu0 %v326
  %355 = vmatprep.subr.mxu0 0.0
  %356 = vmatpush1.msra.mxu0 %v327
  %357 = vmatprep.subr.mxu0 0.0
  %358 = vmatpush1.msra.mxu0 %v328
  %359 = vmatprep.subr.mxu0 0.0
  %360 = vmatpush1.msra.mxu0 %v329
  %361 = vmatprep.subr.mxu0 0.0
  %362 = vmatpush1.msra.mxu0 %v330
  %363 = vmatprep.subr.mxu0 0.0
  %364 = vmatpush1.msra.mxu0 0.0
  %365 = vmatprep.subr.mxu0 0.0
  %366 = vmatpush1.msra.mxu0 0.0
  %367 = vmatprep.subr.mxu0 0.0
  %368 = vmatpush1.msra.mxu0 0.0
  %369 = vmatprep.subr.mxu0 0.0
  %370 = vmatpush1.msra.mxu0 0.0
  %371 = vmatprep.subr.mxu0 0.0
  %372 = vmatpush1.msra.mxu0 0.0
  %373 = vmatprep.subr.mxu0 0.0
  %374 = vmatpush1.msra.mxu0 0.0
  %375 = vmatprep.subr.mxu0 0.0
  %376 = vmatpush1.msra.mxu0 0.0
  %377 = vmatprep.subr.mxu0 0.0
  %378 = vmatpush1.msra.mxu0 0.0
  %379 = vmatprep.subr.mxu0 0.0
  %380 = vmatpush1.msra.mxu0 0.0
  %381 = vmatprep.subr.mxu0 0.0
  %382 = vmatpush1.msra.mxu0 0.0
  %383 = vmatprep.subr.mxu0 0.0
  %384 = vmatpush1.msra.mxu0 0.0
  %385 = vmatprep.subr.mxu0 0.0
  %386 = vmatpush1.msra.mxu0 0.0
  %387 = vmatprep.subr.mxu0 0.0
  %388 = vmatpush1.msra.mxu0 0.0
  %389 = vmatprep.subr.mxu0 0.0
  %390 = vmatpush1.msra.mxu0 0.0
  %391 = vmatprep.subr.mxu0 0.0
  %392 = vmatpush1.msra.mxu0 0.0
  %393 = vmatprep.subr.mxu0 0.0
  %394 = vmatpush1.msra.mxu0 0.0
  %395 = vmatprep.mubr.f32.mxu0 0.0
  %396 = vmatmul.mubr.f32.gmra.mrb[0].mxu0 %v314
  %v397 = vpop.f32.mrb[0].mxu0
  %v398 = vadd.f32 0.0, %v397
  %v399 = vpop.f32.mrb[0].mxu0
  %400 = vdwg.mxu0
  %v401 = vmul.f32 %v398, %v398
  %v403 = vrot.slane %v401, 7
  %v405 = vsub.f32 %v398, %v403
  %v406 = vmax.f32 %v405, 0.0
  %v407 = vadd.f32 %v406, 1e-05
  %v408 = vrsqrt.pop %v407
  %v409 = vlaneseq
  %v410 = vshrl.u32 %v409, 7
  %v411 = vsub.s32 0, %v410
  %v412 = vrot.slane %v398, %v411
  %v413 = vsub.f32 %v273, %v412
  %v414 = vsub.f32 %v278, %v412
  %v415 = vsub.f32 %v283, %v412
  %v416 = vsub.f32 %v288, %v412
  %v417 = vld [vmem:[%s3] sm:$0x1]
  %v419 = vlaneseq
  %v420 = vshrl.u32 %v419, 7
  %v421 = vsub.s32 0, %v420
  %v422 = vrot.slane %v417, %v421
  %v424 = vmul.f32 %v408, %v422
  %v425 = vlaneseq
  %v426 = vshrl.u32 %v425, 7
  %v427 = vsub.s32 1, %v426
  %v428 = vrot.slane %v424, %v427
  %v429 = vmul.f32 %v413, %v428
  %v430 = vmul.f32 %v414, %v428
  %v431 = vmul.f32 %v415, %v428
  %v432 = vmul.f32 %v416, %v428
  %v433 = vld [vmem:[%s4] sm:$0x1]
  %v435 = vlaneseq
  %v436 = vshrl.u32 %v435, 7
  %v437 = vsub.s32 0, %v436
  %v438 = vrot.slane %v433, %v437
  %v440 = vadd.f32 %v429, %v438
  %v441 = vadd.f32 %v430, %v438
  %v442 = vadd.f32 %v431, %v438
  %v443 = vadd.f32 %v432, %v438
  %v444 = vmax.f32 %v440, 0.0
  %v445 = vmax.f32 %v441, 0.0
  %v446 = vmax.f32 %v442, 0.0
  %v447 = vmax.f32 %v443, 0.0
  %v448 = vrot.slane %v444, 7
  %v449 = vrot.slane %v445, 7
  %v450 = vrot.slane %v446, 7
  %v451 = vrot.slane %v447, 7
  %v452 = vsel %vm104, %v450, %v451
  %v453 = vsel %vm104, %v449, %v450
  %v454 = vsel %vm104, %v448, %v449
  %v455 = vsel %vm104, %v451, %v448
  %v456 = vsel %vm113, 0.0, %v455
  %v457 = vsel %vm114, 0.0, %v454
  %v458 = vsel %vm115, 0.0, %v453
  %v459 = vsel %vm116, 0.0, %v452
  %v460 = vrot.slane %v444, 1
  %v461 = vrot.slane %v445, 1
  %v462 = vrot.slane %v446, 1
  %v463 = vrot.slane %v447, 1
  %v464 = vsel %vm125, %v462, %v463
  %v465 = vsel %vm125, %v461, %v462
  %v466 = vsel %vm125, %v460, %v461
  %v467 = vsel %vm125, %v463, %v460
  %v468 = vsel %vm134, 0.0, %v466
  %v469 = vsel %vm135, 0.0, %v465
  %v470 = vsel %vm136, 0.0, %v464
  %v471 = vsel %vm137, 0.0, %v467
  %v472 = vld [vmem:[%s5] sm:$0xff]
  %v473 = vld [vmem:[%s5 + $0x8] sm:$0xff]
  %v474 = vld [vmem:[%s5 + $0x10] sm:$0xff]
  %v475 = vld [vmem:[%s5 + $0x18] sm:$0xff]
  %v476 = vld [vmem:[%s5 + $0x20] sm:$0xff]
  %v477 = vld [vmem:[%s5 + $0x28] sm:$0xff]
  %v478 = vld [vmem:[%s5 + $0x30] sm:$0xff]
  %v479 = vld [vmem:[%s5 + $0x38] sm:$0xff]
  %v480 = vld [vmem:[%s5 + $0x40] sm:$0xff]
  %v481 = vld [vmem:[%s5 + $0x48] sm:$0xff]
  %v482 = vld [vmem:[%s5 + $0x50] sm:$0xff]
  %v483 = vld [vmem:[%s5 + $0x58] sm:$0xff]
  %v484 = vld [vmem:[%s5 + $0x60] sm:$0xff]
  %v485 = vld [vmem:[%s5 + $0x68] sm:$0xff]
  %v486 = vld [vmem:[%s5 + $0x70] sm:$0xff]
  %v487 = vld [vmem:[%s5 + $0x78] sm:$0xff]
  %v488 = vld [vmem:[%s5 + $0x80] sm:$0xff]
  %v489 = vld [vmem:[%s5 + $0x88] sm:$0xff]
  %v490 = vld [vmem:[%s5 + $0x90] sm:$0xff]
  %v491 = vld [vmem:[%s5 + $0x98] sm:$0xff]
  %v492 = vld [vmem:[%s5 + $0xa0] sm:$0xff]
  %v493 = vld [vmem:[%s5 + $0xa8] sm:$0xff]
  %v494 = vld [vmem:[%s5 + $0xb0] sm:$0xff]
  %v495 = vld [vmem:[%s5 + $0xb8] sm:$0xff]
  %v496 = vld [vmem:[%s5 + $0xc0] sm:$0xff]
  %v497 = vld [vmem:[%s5 + $0xc8] sm:$0xff]
  %v498 = vld [vmem:[%s5 + $0xd0] sm:$0xff]
  %v499 = vld [vmem:[%s5 + $0xd8] sm:$0xff]
  %v500 = vld [vmem:[%s5 + $0xe0] sm:$0xff]
  %v501 = vld [vmem:[%s5 + $0xe8] sm:$0xff]
  %v502 = vld [vmem:[%s5 + $0xf0] sm:$0xff]
  %v503 = vld [vmem:[%s5 + $0xf8] sm:$0xff]
  %v504 = vld [vmem:[%s5 + $0x100] sm:$0xff]
  %v505 = vld [vmem:[%s5 + $0x108] sm:$0xff]
  %v506 = vld [vmem:[%s5 + $0x110] sm:$0xff]
  %v507 = vld [vmem:[%s5 + $0x118] sm:$0xff]
  %v508 = vld [vmem:[%s5 + $0x120] sm:$0xff]
  %v509 = vld [vmem:[%s5 + $0x128] sm:$0xff]
  %v510 = vld [vmem:[%s5 + $0x130] sm:$0xff]
  %v511 = vld [vmem:[%s5 + $0x138] sm:$0xff]
  %v512 = vld [vmem:[%s5 + $0x140] sm:$0xff]
  %v513 = vld [vmem:[%s5 + $0x148] sm:$0xff]
  %v514 = vld [vmem:[%s5 + $0x150] sm:$0xff]
  %v515 = vld [vmem:[%s5 + $0x158] sm:$0xff]
  %v516 = vld [vmem:[%s5 + $0x160] sm:$0xff]
  %v517 = vld [vmem:[%s5 + $0x168] sm:$0xff]
  %v518 = vld [vmem:[%s5 + $0x170] sm:$0xff]
  %v519 = vld [vmem:[%s5 + $0x178] sm:$0xff]
  %v520 = vld [vmem:[%s6] sm:$0x1]
  %v522 = vlaneseq
  %v523 = vshrl.u32 %v522, 7
  %v524 = vsub.s32 0, %v523
  %v525 = vrot.slane %v520, %v524
  %527 = vmatprep.subr.mxu0 0.0
  %528 = vmatpush1.msra.mxu0 %v472
  %529 = vmatprep.subr.mxu0 0.0
  %530 = vmatpush1.msra.mxu0 %v473
  %531 = vmatprep.subr.mxu0 0.0
  %532 = vmatpush1.msra.mxu0 %v474
  %533 = vmatprep.subr.mxu0 0.0
  %534 = vmatpush1.msra.mxu0 %v475
  %535 = vmatprep.subr.mxu0 0.0
  %536 = vmatpush1.msra.mxu0 %v476
  %537 = vmatprep.subr.mxu0 0.0
  %538 = vmatpush1.msra.mxu0 %v477
  %539 = vmatprep.subr.mxu0 0.0
  %540 = vmatpush1.msra.mxu0 %v478
  %541 = vmatprep.subr.mxu0 0.0
  %542 = vmatpush1.msra.mxu0 %v479
  %543 = vmatprep.subr.mxu0 0.0
  %544 = vmatpush1.msra.mxu0 %v480
  %545 = vmatprep.subr.mxu0 0.0
  %546 = vmatpush1.msra.mxu0 %v481
  %547 = vmatprep.subr.mxu0 0.0
  %548 = vmatpush1.msra.mxu0 %v482
  %549 = vmatprep.subr.mxu0 0.0
  %550 = vmatpush1.msra.mxu0 %v483
  %551 = vmatprep.subr.mxu0 0.0
  %552 = vmatpush1.msra.mxu0 %v484
  %553 = vmatprep.subr.mxu0 0.0
  %554 = vmatpush1.msra.mxu0 %v485
  %555 = vmatprep.subr.mxu0 0.0
  %556 = vmatpush1.msra.mxu0 %v486
  %557 = vmatprep.subr.mxu0 0.0
  %558 = vmatpush1.msra.mxu0 %v487
  %559 = vmatprep.subr.mxu0 0.0
  %560 = vmatpush1.msra.mxu0 %v488
  %561 = vmatprep.subr.mxu0 0.0
  %562 = vmatpush1.msra.mxu0 %v489
  %563 = vmatprep.subr.mxu0 0.0
  %564 = vmatpush1.msra.mxu0 %v490
  %565 = vmatprep.subr.mxu0 0.0
  %566 = vmatpush1.msra.mxu0 %v491
  %567 = vmatprep.subr.mxu0 0.0
  %568 = vmatpush1.msra.mxu0 %v492
  %569 = vmatprep.subr.mxu0 0.0
  %570 = vmatpush1.msra.mxu0 %v493
  %571 = vmatprep.subr.mxu0 0.0
  %572 = vmatpush1.msra.mxu0 %v494
  %573 = vmatprep.subr.mxu0 0.0
  %574 = vmatpush1.msra.mxu0 %v495
  %575 = vmatprep.subr.mxu0 0.0
  %576 = vmatpush1.msra.mxu0 %v496
  %577 = vmatprep.subr.mxu0 0.0
  %578 = vmatpush1.msra.mxu0 %v497
  %579 = vmatprep.subr.mxu0 0.0
  %580 = vmatpush1.msra.mxu0 %v498
  %581 = vmatprep.subr.mxu0 0.0
  %582 = vmatpush1.msra.mxu0 %v499
  %583 = vmatprep.subr.mxu0 0.0
  %584 = vmatpush1.msra.mxu0 %v500
  %585 = vmatprep.subr.mxu0 0.0
  %586 = vmatpush1.msra.mxu0 %v501
  %587 = vmatprep.subr.mxu0 0.0
  %588 = vmatpush1.msra.mxu0 %v502
  %589 = vmatprep.subr.mxu0 0.0
  %590 = vmatpush1.msra.mxu0 %v503
  %591 = vmatprep.mubr.f32.mxu0 %v444
  %592 = vmatmul.mubr.f32.gmra.mrb[0].mxu0 %v456
  %v593 = vpop.f32.mrb[0].mxu0
  %v594 = vadd.f32 %v525, %v593
  %v595 = vpop.f32.mrb[0].mxu0
  %596 = vmatprep.mubr.f32.mxu0 %v445
  %597 = vmatmul.mubr.f32.gmra.mrb[0].mxu0 %v457
  %v598 = vpop.f32.mrb[0].mxu0
  %v599 = vadd.f32 %v525, %v598
  %v600 = vpop.f32.mrb[0].mxu0
  %601 = vmatprep.mubr.f32.mxu0 %v446
  %602 = vmatmul.mubr.f32.gmra.mrb[0].mxu0 %v458
  %v603 = vpop.f32.mrb[0].mxu0
  %v604 = vadd.f32 %v525, %v603
  %v605 = vpop.f32.mrb[0].mxu0
  %606 = vmatprep.mubr.f32.mxu0 %v447
  %607 = vmatmul.mubr.f32.gmra.mrb[0].mxu0 %v459
  %v608 = vpop.f32.mrb[0].mxu0
  %v609 = vadd.f32 %v525, %v608
  %v610 = vpop.f32.mrb[0].mxu0
  %611 = vdwg.mxu0
  %612 = vmatprep.subr.mxu0 0.0
  %613 = vmatpush1.msra.mxu0 %v504
  %614 = vmatprep.subr.mxu0 0.0
  %615 = vmatpush1.msra.mxu0 %v505
  %616 = vmatprep.subr.mxu0 0.0
  %617 = vmatpush1.msra.mxu0 %v506
  %618 = vmatprep.subr.mxu0 0.0
  %619 = vmatpush1.msra.mxu0 %v507
  %620 = vmatprep.subr.mxu0 0.0
  %621 = vmatpush1.msra.mxu0 %v508
  %622 = vmatprep.subr.mxu0 0.0
  %623 = vmatpush1.msra.mxu0 %v509
  %624 = vmatprep.subr.mxu0 0.0
  %625 = vmatpush1.msra.mxu0 %v510
  %626 = vmatprep.subr.mxu0 0.0
  %627 = vmatpush1.msra.mxu0 %v511
  %628 = vmatprep.subr.mxu0 0.0
  %629 = vmatpush1.msra.mxu0 %v512
  %630 = vmatprep.subr.mxu0 0.0
  %631 = vmatpush1.msra.mxu0 %v513
  %632 = vmatprep.subr.mxu0 0.0
  %633 = vmatpush1.msra.mxu0 %v514
  %634 = vmatprep.subr.mxu0 0.0
  %635 = vmatpush1.msra.mxu0 %v515
  %636 = vmatprep.subr.mxu0 0.0
  %637 = vmatpush1.msra.mxu0 %v516
  %638 = vmatprep.subr.mxu0 0.0
  %639 = vmatpush1.msra.mxu0 %v517
  %640 = vmatprep.subr.mxu0 0.0
  %641 = vmatpush1.msra.mxu0 %v518
  %642 = vmatprep.subr.mxu0 0.0
  %643 = vmatpush1.msra.mxu0 %v519
  %644 = vmatprep.subr.mxu0 0.0
  %645 = vmatpush1.msra.mxu0 0.0
  %646 = vmatprep.subr.mxu0 0.0
  %647 = vmatpush1.msra.mxu0 0.0
  %648 = vmatprep.subr.mxu0 0.0
  %649 = vmatpush1.msra.mxu0 0.0
  %650 = vmatprep.subr.mxu0 0.0
  %651 = vmatpush1.msra.mxu0 0.0
  %652 = vmatprep.subr.mxu0 0.0
  %653 = vmatpush1.msra.mxu0 0.0
  %654 = vmatprep.subr.mxu0 0.0
  %655 = vmatpush1.msra.mxu0 0.0
  %656 = vmatprep.subr.mxu0 0.0
  %657 = vmatpush1.msra.mxu0 0.0
  %658 = vmatprep.subr.mxu0 0.0
  %659 = vmatpush1.msra.mxu0 0.0
  %660 = vmatprep.subr.mxu0 0.0
  %661 = vmatpush1.msra.mxu0 0.0
  %662 = vmatprep.subr.mxu0 0.0
  %663 = vmatpush1.msra.mxu0 0.0
  %664 = vmatprep.subr.mxu0 0.0
  %665 = vmatpush1.msra.mxu0 0.0
  %666 = vmatprep.subr.mxu0 0.0
  %667 = vmatpush1.msra.mxu0 0.0
  %668 = vmatprep.subr.mxu0 0.0
  %669 = vmatpush1.msra.mxu0 0.0
  %670 = vmatprep.subr.mxu0 0.0
  %671 = vmatpush1.msra.mxu0 0.0
  %672 = vmatprep.subr.mxu0 0.0
  %673 = vmatpush1.msra.mxu0 0.0
  %674 = vmatprep.subr.mxu0 0.0
  %675 = vmatpush1.msra.mxu0 0.0
  %676 = vmatprep.mubr.f32.mxu0 0.0
  %677 = vmatmul.mubr.f32.gmra.mrb[0].mxu0 %v468
  %v678 = vpop.f32.mrb[0].mxu0
  %v679 = vadd.f32 %v594, %v678
  %v680 = vpop.f32.mrb[0].mxu0
  %681 = vmatprep.mubr.f32.mxu0 0.0
  %682 = vmatmul.mubr.f32.gmra.mrb[0].mxu0 %v469
  %v683 = vpop.f32.mrb[0].mxu0
  %v684 = vadd.f32 %v599, %v683
  %v685 = vpop.f32.mrb[0].mxu0
  %686 = vmatprep.mubr.f32.mxu0 0.0
  %687 = vmatmul.mubr.f32.gmra.mrb[0].mxu0 %v470
  %v688 = vpop.f32.mrb[0].mxu0
  %v689 = vadd.f32 %v604, %v688
  %v690 = vpop.f32.mrb[0].mxu0
  %691 = vmatprep.mubr.f32.mxu0 0.0
  %692 = vmatmul.mubr.f32.gmra.mrb[0].mxu0 %v471
  %v693 = vpop.f32.mrb[0].mxu0
  %v694 = vadd.f32 %v609, %v693
  %v695 = vpop.f32.mrb[0].mxu0
  %696 = vdwg.mxu0
  %v697 = vadd.f32 %v679, %v684
  %v698 = vadd.f32 %v697, %v689
  %v699 = vadd.f32 %v698, %v694
  %v700 = vrot.slane %v699, 4
  %v701 = vadd.f32 %v699, %v700
  %v702 = vrot.slane %v701, 2
  %v703 = vadd.f32 %v701, %v702
  %v704 = vrot.slane %v703, 1
  %v705 = vadd.f32 %v703, %v704
  %v706 = vmul.f32 %v679, %v679
  %v707 = vmul.f32 %v684, %v684
  %v708 = vmul.f32 %v689, %v689
  %v709 = vmul.f32 %v694, %v694
  %v710 = vadd.f32 %v706, %v707
  %v711 = vadd.f32 %v710, %v708
  %v712 = vadd.f32 %v711, %v709
  %v713 = vrot.slane %v712, 4
  %v714 = vadd.f32 %v712, %v713
  %v715 = vrot.slane %v714, 2
  %v716 = vadd.f32 %v714, %v715
  %v717 = vrot.slane %v716, 1
  %v718 = vadd.f32 %v716, %v717
  %v719 = vsel %vm313, %v705, %v718
  %720 = vmatprep.subr.mxu0 0.0
  %721 = vmatpush1.msra.mxu0 %v315
  %722 = vmatprep.subr.mxu0 0.0
  %723 = vmatpush1.msra.mxu0 %v316
  %724 = vmatprep.subr.mxu0 0.0
  %725 = vmatpush1.msra.mxu0 %v317
  %726 = vmatprep.subr.mxu0 0.0
  %727 = vmatpush1.msra.mxu0 %v318
  %728 = vmatprep.subr.mxu0 0.0
  %729 = vmatpush1.msra.mxu0 %v319
  %730 = vmatprep.subr.mxu0 0.0
  %731 = vmatpush1.msra.mxu0 %v320
  %732 = vmatprep.subr.mxu0 0.0
  %733 = vmatpush1.msra.mxu0 %v321
  %734 = vmatprep.subr.mxu0 0.0
  %735 = vmatpush1.msra.mxu0 %v322
  %736 = vmatprep.subr.mxu0 0.0
  %737 = vmatpush1.msra.mxu0 %v323
  %738 = vmatprep.subr.mxu0 0.0
  %739 = vmatpush1.msra.mxu0 %v324
  %740 = vmatprep.subr.mxu0 0.0
  %741 = vmatpush1.msra.mxu0 %v325
  %742 = vmatprep.subr.mxu0 0.0
  %743 = vmatpush1.msra.mxu0 %v326
  %744 = vmatprep.subr.mxu0 0.0
  %745 = vmatpush1.msra.mxu0 %v327
  %746 = vmatprep.subr.mxu0 0.0
  %747 = vmatpush1.msra.mxu0 %v328
  %748 = vmatprep.subr.mxu0 0.0
  %749 = vmatpush1.msra.mxu0 %v329
  %750 = vmatprep.subr.mxu0 0.0
  %751 = vmatpush1.msra.mxu0 %v330
  %752 = vmatprep.subr.mxu0 0.0
  %753 = vmatpush1.msra.mxu0 0.0
  %754 = vmatprep.subr.mxu0 0.0
  %755 = vmatpush1.msra.mxu0 0.0
  %756 = vmatprep.subr.mxu0 0.0
  %757 = vmatpush1.msra.mxu0 0.0
  %758 = vmatprep.subr.mxu0 0.0
  %759 = vmatpush1.msra.mxu0 0.0
  %760 = vmatprep.subr.mxu0 0.0
  %761 = vmatpush1.msra.mxu0 0.0
  %762 = vmatprep.subr.mxu0 0.0
  %763 = vmatpush1.msra.mxu0 0.0
  %764 = vmatprep.subr.mxu0 0.0
  %765 = vmatpush1.msra.mxu0 0.0
  %766 = vmatprep.subr.mxu0 0.0
  %767 = vmatpush1.msra.mxu0 0.0
  %768 = vmatprep.subr.mxu0 0.0
  %769 = vmatpush1.msra.mxu0 0.0
  %770 = vmatprep.subr.mxu0 0.0
  %771 = vmatpush1.msra.mxu0 0.0
  %772 = vmatprep.subr.mxu0 0.0
  %773 = vmatpush1.msra.mxu0 0.0
  %774 = vmatprep.subr.mxu0 0.0
  %775 = vmatpush1.msra.mxu0 0.0
  %776 = vmatprep.subr.mxu0 0.0
  %777 = vmatpush1.msra.mxu0 0.0
  %778 = vmatprep.subr.mxu0 0.0
  %779 = vmatpush1.msra.mxu0 0.0
  %780 = vmatprep.subr.mxu0 0.0
  %781 = vmatpush1.msra.mxu0 0.0
  %782 = vmatprep.subr.mxu0 0.0
  %783 = vmatpush1.msra.mxu0 0.0
  %784 = vmatprep.mubr.f32.mxu0 0.0
  %785 = vmatmul.mubr.f32.gmra.mrb[0].mxu0 %v719
  %v786 = vpop.f32.mrb[0].mxu0
  %v787 = vadd.f32 0.0, %v786
  %v788 = vpop.f32.mrb[0].mxu0
  %789 = vdwg.mxu0
  %v790 = vmul.f32 %v787, %v787
  %v792 = vrot.slane %v790, 7
  %v794 = vsub.f32 %v787, %v792
  %v795 = vmax.f32 %v794, 0.0
  %v796 = vadd.f32 %v795, 1e-05
  %v797 = vrsqrt.pop %v796
  %v798 = vlaneseq
  %v799 = vshrl.u32 %v798, 7
  %v800 = vsub.s32 0, %v799
  %v801 = vrot.slane %v787, %v800
  %v802 = vsub.f32 %v679, %v801
  %v803 = vsub.f32 %v684, %v801
  %v804 = vsub.f32 %v689, %v801
  %v805 = vsub.f32 %v694, %v801
  %v806 = vld [vmem:[%s7] sm:$0x1]
  %v808 = vlaneseq
  %v809 = vshrl.u32 %v808, 7
  %v810 = vsub.s32 0, %v809
  %v811 = vrot.slane %v806, %v810
  %v813 = vmul.f32 %v797, %v811
  %v814 = vlaneseq
  %v815 = vshrl.u32 %v814, 7
  %v816 = vsub.s32 1, %v815
  %v817 = vrot.slane %v813, %v816
  %v818 = vmul.f32 %v802, %v817
  %v819 = vmul.f32 %v803, %v817
  %v820 = vmul.f32 %v804, %v817
  %v821 = vmul.f32 %v805, %v817
  %v822 = vld [vmem:[%s8] sm:$0x1]
  %v824 = vlaneseq
  %v825 = vshrl.u32 %v824, 7
  %v826 = vsub.s32 0, %v825
  %v827 = vrot.slane %v822, %v826
  %v829 = vadd.f32 %v818, %v827
  %v830 = vadd.f32 %v819, %v827
  %v831 = vadd.f32 %v820, %v827
  %v832 = vadd.f32 %v821, %v827
  %v833 = vmax.f32 %v829, 0.0
  %v834 = vmax.f32 %v830, 0.0
  %v835 = vmax.f32 %v831, 0.0
  %v836 = vmax.f32 %v832, 0.0
  %837 = vst [vmem:[%s10] sm:$0xff] %v833
  %838 = vst [vmem:[%s10 + $0x8] sm:$0xff] %v834
  %839 = vst [vmem:[%s10 + $0x10] sm:$0xff] %v835
  %840 = vst [vmem:[%s10 + $0x18] sm:$0xff] %v836
  // Predicated region
  $region42: #{double_conv.1} parent=0 // pred_check
    _
  $region43: #{double_conv.1} parent=0 // pred_check_branch
    %842 = sbr.rel (0) target = $region45
  $region44: #{double_conv.1} parent=0 // pred_region
    _
  $region45: #{double_conv.1} parent=0 // pred_fallthru
    _
  // Predicated region
  $region46: #{double_conv.1} parent=0 // pred_check
    _
  $region47: #{double_conv.1} parent=0 // pred_check_branch
    %844 = sbr.rel (0) target = $region49
  $region48: #{double_conv.1} parent=0 // pred_region
    _
  $region49: #{double_conv.1} parent=0 // pred_fallthru
    _

</llo_original>
